<compile_context>
chip_gen: v5e
topology: v5e:2x2
jax: 0.10.0
libtpu: 0.0.40
codegen_flags: <defaults>
</compile_context>

<pallas_src>
import functools

import jax
import jax.numpy as jnp
from jax.experimental import pallas as pl
from jax.experimental.pallas import tpu as pltpu


def _high_threshold_dc_kernel(a_ref, b_ref, x_ref, o_ref, *, inv_hw):
    # a_ref, b_ref: (NC_pad, 1) resident per-row fused coefficients
    # x_ref, o_ref: (tr, HW_pad) streaming tiles
    tr = x_ref.shape[0]
    r0 = pl.multiple_of(pl.program_id(0) * tr, 8)
    a = a_ref[pl.ds(r0, tr), :]                       # (tr, 1)
    b = b_ref[pl.ds(r0, tr), :]                       # (tr, 1)
    x = x_ref[...].astype(jnp.float32)                # (tr, HW_pad)
    # Padded lanes are zero, so dividing the sum by the *true* HW gives the
    # exact global-average-pool value for every real row.
    mean = jnp.sum(x, axis=-1, keepdims=True) * inv_hw
    o_ref[...] = (x * a + mean * b).astype(o_ref.dtype)


def _round_up(v, m):
    return (v + m - 1) // m * m


def high_threshold_dc(x, fscale_d, fscale_h, *, target_tile_bytes=2 << 20):
    """Pallas TPU implementation of HighThresholdDC.forward.

    x:        (N, C, H, W) float32
    fscale_d: (C,)         float32
    fscale_h: (C,)         float32
    returns:  (N, C, H, W) float32
    """
    N, C, H, W = x.shape
    NC, HW = N * C, H * W

    # Lane-dense spatial dim; sublane-aligned row count.
    hw_pad = _round_up(HW, 128)
    nc8 = _round_up(NC, 8)

    # Row tile: ~2 MiB per x tile, multiple of 8, capped by the row count.
    # Keep the grid length >= 2 when possible so v7x can shard across its
    # two TensorCores.
    tr = max(8, (target_tile_bytes // (4 * hw_pad)) // 8 * 8)
    tr = min(tr, nc8)
    if tr == nc8 and nc8 >= 16:
        tr = max(8, (nc8 // 2) // 8 * 8)
    nc_pad = _round_up(nc8, tr)
    grid = (nc_pad // tr,)
    # TODO(synk): for very large spatial maps (HW >~ 256K elements) add a
    # second, "arbitrary" HW grid axis with a (tr,1) accumulator instead of
    # holding a full row in one block.

    # Flatten to (NC, HW) rows and zero-pad to the hardware-friendly shape.
    x2 = x.reshape(NC, HW).astype(jnp.float32)
    x2 = jnp.pad(x2, ((0, nc_pad - NC), (0, hw_pad - HW)))

    # Fused coefficients:  out = x*(sh+1) + mean*(sd - sh - 1)
    a_c = fscale_h.astype(jnp.float32) + 1.0
    b_c = fscale_d.astype(jnp.float32) - fscale_h.astype(jnp.float32) - 1.0
    a_rows = jnp.pad(jnp.tile(a_c, (N,)), (0, nc_pad - NC)).reshape(nc_pad, 1)
    b_rows = jnp.pad(jnp.tile(b_c, (N,)), (0, nc_pad - NC)).reshape(nc_pad, 1)

    # Double-buffered in + out tiles (~4x tile bytes) plus resident scales.
    tile_bytes = 4 * tr * hw_pad
    vmem_limit = int(min(48 << 20, max(32 << 20, 6 * tile_bytes)))

    kernel = functools.partial(_high_threshold_dc_kernel, inv_hw=1.0 / float(HW))

    out = pl.pallas_call(
        kernel,
        out_shape=jax.ShapeDtypeStruct((nc_pad, hw_pad), jnp.float32),
        grid_spec=pltpu.PrefetchScalarGridSpec(
            num_scalar_prefetch=0,
            grid=grid,
            in_specs=[
                pl.BlockSpec((nc_pad, 1), lambda i: (0, 0)),    # a: resident
                pl.BlockSpec((nc_pad, 1), lambda i: (0, 0)),    # b: resident
                pl.BlockSpec((tr, hw_pad), lambda i: (i, 0)),   # x: streamed
            ],
            out_specs=pl.BlockSpec((tr, hw_pad), lambda i: (i, 0)),
        ),
        compiler_params=pltpu.CompilerParams(
            dimension_semantics=("parallel",),
            vmem_limit_bytes=vmem_limit,
        ),
    )(a_rows, b_rows, x2)

    return out[:NC, :HW].reshape(N, C, H, W).astype(x.dtype)


def high_threshold_dc_ref(x, fscale_d, fscale_h):
    """Pure-JAX reference matching the PyTorch forward exactly."""
    x_d = jnp.mean(x, axis=(2, 3), keepdims=True)
    x_h = (x - x_d) * (fscale_h[None, :, None, None] + 1.0)
    x_d = x_d * fscale_d[None, :, None, None]
    return x_d + x_h


if __name__ == "__main__":
    key = jax.random.PRNGKey(0)
    k1, k2, k3 = jax.random.split(key, 3)

    # Small canonical shape from the module spec.
    N, C, H, W = 2, 4, 16, 16
    x = jax.random.normal(k1, (N, C, H, W), dtype=jnp.float32)
    # nn.Parameter(torch.zeros(C)) -> zeros; perturb so both paths are exercised.
    fscale_d = 0.1 * jax.random.normal(k2, (C,), dtype=jnp.float32)
    fscale_h = 0.1 * jax.random.normal(k3, (C,), dtype=jnp.float32)

    out = jax.block_until_ready(high_threshold_dc(x, fscale_d, fscale_h))
    ref = high_threshold_dc_ref(x, fscale_d, fscale_h)
    assert out.shape == (N, C, H, W)
    assert jnp.allclose(out, ref, atol=1e-5, rtol=1e-5), "mismatch vs reference"

    # Exercise the padding paths: NC not a multiple of 8, HW not a multiple of 128.
    N2, C2, H2, W2 = 1, 3, 10, 10
    x_odd = jax.random.normal(k1, (N2, C2, H2, W2), dtype=jnp.float32)
    fd2 = 0.1 * jax.random.normal(k2, (C2,), dtype=jnp.float32)
    fh2 = 0.1 * jax.random.normal(k3, (C2,), dtype=jnp.float32)
    out2 = jax.block_until_ready(high_threshold_dc(x_odd, fd2, fh2))
    ref2 = high_threshold_dc_ref(x_odd, fd2, fh2)
    assert jnp.allclose(out2, ref2, atol=1e-5, rtol=1e-5), "mismatch (padded case)"

    print("KERNEL_OK")
</pallas_src>

<mosaic_0001>
module attributes {stable_mosaic.version = 11 : i64} {
  func.func @_high_threshold_dc_kernel(%arg0: i32, %arg1: memref<8x1xf32, #tpu.memory_space<vmem>>, %arg2: memref<8x1xf32, #tpu.memory_space<vmem>>, %arg3: memref<8x256xf32, #tpu.memory_space<vmem>>, %arg4: memref<8x256xf32, #tpu.memory_space<vmem>>) attributes {dimension_semantics = [#tpu.dimension_semantics<parallel>], iteration_bounds = array<i64: 1>, scalar_prefetch = 0 : i64, scratch_operands = 0 : i64, tpu.core_type = #tpu.core_type<tc>, window_params = [{pipeline_mode = #tpu.pipeline_mode<synchronous>, transform_indices = @transform_0, window_bounds = array<i64: 8, 1>}, {pipeline_mode = #tpu.pipeline_mode<synchronous>, transform_indices = @transform_1, window_bounds = array<i64: 8, 1>}, {transform_indices = @transform_2, window_bounds = array<i64: 8, 256>}, {transform_indices = @transform_3, window_bounds = array<i64: 8, 256>}]} {
    %c8_i32 = arith.constant 8 : i32
    %0 = arith.muli %arg0, %c8_i32 : i32
    %1 = tpu.assume_multiple %0, 8 : i32
    %2 = arith.index_cast %1 : i32 to index
    %c0 = arith.constant 0 : index
    %3 = vector.load %arg1[%2, %c0] : memref<8x1xf32, #tpu.memory_space<vmem>>, vector<8x1xf32>
    %4 = arith.index_cast %1 : i32 to index
    %c0_0 = arith.constant 0 : index
    %5 = vector.load %arg2[%4, %c0_0] : memref<8x1xf32, #tpu.memory_space<vmem>>, vector<8x1xf32>
    %c0_1 = arith.constant 0 : index
    %c0_2 = arith.constant 0 : index
    %6 = vector.load %arg3[%c0_1, %c0_2] : memref<8x256xf32, #tpu.memory_space<vmem>>, vector<8x256xf32>
    %cst = arith.constant dense<0.000000e+00> : vector<8xf32>
    %7 = vector.multi_reduction <add>, %6, %cst [1] : vector<8x256xf32> to vector<8xf32>
    %8 = vector.shape_cast %7 : vector<8xf32> to vector<8x1xf32>
    %cst_3 = arith.constant 3.906250e-03 : f32
    %9 = vector.broadcast %cst_3 : f32 to vector<8x1xf32>
    %10 = arith.mulf %8, %9 : vector<8x1xf32>
    %11 = vector.broadcast %3 : vector<8x1xf32> to vector<8x256xf32>
    %12 = arith.mulf %6, %11 : vector<8x256xf32>
    %13 = arith.mulf %10, %5 : vector<8x1xf32>
    %14 = vector.broadcast %13 : vector<8x1xf32> to vector<8x256xf32>
    %15 = arith.addf %12, %14 : vector<8x256xf32>
    %c0_4 = arith.constant 0 : index
    %c0_5 = arith.constant 0 : index
    %16 = vector.load %arg4[%c0_4, %c0_5] : memref<8x256xf32, #tpu.memory_space<vmem>>, vector<8x256xf32>
    tpu.vector_store %arg4[%c0_4, %c0_5], %15 {strides = array<i32>} : memref<8x256xf32, #tpu.memory_space<vmem>>, vector<8x256xf32>,
    return
  }
  func.func @transform_0(%arg0: i32) -> (i32, i32) {
    %c0_i32 = arith.constant 0 : i32
    %c0_i32_0 = arith.constant 0 : i32
    %c0_i32_1 = arith.constant 0 : i32
    return %c0_i32, %c0_i32_0 : i32, i32
  }
  func.func @transform_1(%arg0: i32) -> (i32, i32) {
    %c0_i32 = arith.constant 0 : i32
    %c0_i32_0 = arith.constant 0 : i32
    %c0_i32_1 = arith.constant 0 : i32
    return %c0_i32, %c0_i32_0 : i32, i32
  }
  func.func @transform_2(%arg0: i32) -> (i32, i32) {
    %c0_i32 = arith.constant 0 : i32
    %c0_i32_0 = arith.constant 0 : i32
    return %arg0, %c0_i32 : i32, i32
  }
  func.func @transform_3(%arg0: i32) -> (i32, i32) {
    %c0_i32 = arith.constant 0 : i32
    %c0_i32_0 = arith.constant 0 : i32
    return %arg0, %c0_i32 : i32, i32
  }
}

</mosaic_0001>

<llo_original>
// kernel: tpu_custom_call.1
$region0: #{tpu_custom_call.1}
  #allocation0 [shape = 'u32[]', space=smem, size = 0x4, offset = 0x4, fixed_abs, tag = 'smem constant byte address 0x4 - core index']
  #allocation1 [shape = 'u32[72,128]{1,0:T(1,128)}', space=vmem, size = 0x9000, scoped, tag = 'internal scratch']
  %s0 = inlined_call_operand.vmem [shape: f32[8,1], index: 0, kind: input, shape index: {}]
  %s1 = inlined_call_operand.vmem [shape: f32[8,1], index: 1, kind: input, shape index: {}]
  %s2 = inlined_call_operand.vmem [shape: f32[8,256], index: 2, kind: input, shape index: {}]
  %s3 = inlined_call_operand.hbm [shape: f32[8,256], index: 3, kind: output, shape index: {}]
  %s4 = sld [smem:[#allocation0]]
  $region22: #{tpu_custom_call.1} parent=0
    _
  %s6 = ssub.s32 1, %s4
  %s7 = scalar_select 0, %s6, %s4
  $region1: #{tpu_custom_call.1} parent=0
    #allocation2 [shape = 'u8[8192]{0}', space=vmem, size = 0x2000, scoped, tag = 'output window, operand 0, single buffered']
    #allocation3 [shape = 's32[1]{0}', space=sflag, size = 0x4, scoped, tag = 'scoped memory for tpu_custom_call.1']
    %8 = vsyncpa [#allocation3], 0
    // Predicated region
    $region2: #{tpu_custom_call.1} parent=1 // pred_check
      _
    $region3: #{tpu_custom_call.1} parent=1 // pred_check_branch
      %10 = sbr.rel (0) target = $region5
    $region4: #{tpu_custom_call.1} parent=1 // pred_region
      _
    $region5: #{tpu_custom_call.1} parent=1 // pred_fallthru
      _
    // Predicated region
    $region6: #{tpu_custom_call.1} parent=1 // pred_check
      _
    $region7: #{tpu_custom_call.1} parent=1 // pred_check_branch
      %12 = sbr.rel (0) target = $region9
    $region8: #{tpu_custom_call.1} parent=1 // pred_region
      _
    $region9: #{tpu_custom_call.1} parent=1 // pred_fallthru
      _
    // Predicated region
    $region10: #{tpu_custom_call.1} parent=1 // pred_check
      _
    $region11: #{tpu_custom_call.1} parent=1 // pred_check_branch
      %14 = sbr.rel (0) target = $region13
    $region12: #{tpu_custom_call.1} parent=1 // pred_region
      _
    $region13: #{tpu_custom_call.1} parent=1 // pred_fallthru
      _
    %s15 = smul.u32 0, 8
    %s16 = scalar_lea.vmem %s0, %s15
    %v17 = vld [vmem:[%s16] sm:$0xff]
    %s18 = scalar_lea.vmem %s1, %s15
    %v19 = vld [vmem:[%s18] sm:$0xff]
    %v20 = vld [vmem:[%s2] sm:$0xff]
    %v21 = vld [vmem:[%s2 + $0x8] sm:$0xff]
    %v22 = vadd.f32 %v20, %v21
    %23 = vadd.xlane.f32.xlu0 %v22
    %v24 = vpop.xlane.xlu0 %23
    %v25 = vmul.f32 %v24, 0.00390625
    %27 = vset.pattern.permute.xlu0 0
    %28 = vperm.xlu0 %27, %v17
    %v29 = vpop.permute.xlu0 %28
    %v31 = vmul.f32 %v20, %v29
    %v32 = vmul.f32 %v21, %v29
    %v33 = vmul.f32 %v25, %v19
    %35 = vset.pattern.permute.xlu0 0
    %36 = vperm.xlu0 %35, %v33
    %v37 = vpop.permute.xlu0 %36
    %v39 = vadd.f32 %v31, %v37
    %v40 = vadd.f32 %v32, %v37
    %41 = vst [vmem:[#allocation2] sm:$0xff] %v39
    %42 = vst [vmem:[#allocation2 + $0x8] sm:$0xff] %v40
    // Predicated region
    $region14: #{tpu_custom_call.1} parent=1 // pred_check
      _
    $region15: #{tpu_custom_call.1} parent=1 // pred_check_branch
      %44 = sbr.rel (0) target = $region17
    $region16: #{tpu_custom_call.1} parent=1 // pred_region
      %46 = vsyncadd [#allocation3], 0
      %s48 = sshll.u32 [#allocation2], 4
      %s49 = int_to_ptr.vmem [resolvable:$true] %s48
      %s50 = sshll.u32 %s3, 4
      %s51 = int_to_ptr.hbm [resolvable:$true] %s50
      %53 = dma.vmem_to_hbm [thread:$0]  %s49, 256, %s51, [#allocation3]
    $region17: #{tpu_custom_call.1} parent=1 // pred_fallthru
      _
    // Predicated region
    $region18: #{tpu_custom_call.1} parent=1 // pred_check
      _
    $region19: #{tpu_custom_call.1} parent=1 // pred_check_branch
      %55 = sbr.rel (0) target = $region21
    $region20: #{tpu_custom_call.1} parent=1 // pred_region
      %57 = dma.done [#allocation3], 256
    $region21: #{tpu_custom_call.1} parent=1 // pred_fallthru
      _
    %58 = vsyncpa [#allocation3], 1

</llo_original>
